<compile_context>
chip_gen: v5e
topology: v5e:2x2
jax: 0.10.0
libtpu: 0.0.40
codegen_flags: <defaults>
</compile_context>

<pallas_src>
import jax
import jax.numpy as jnp
from jax.experimental import pallas as pl
from jax.experimental.pallas import tpu as pltpu


def _phrase_kernel(x_ref, w_ref, b_ref, out_ref):
    # x_ref: (TB, L, H)   w_ref: (H, 6H)   b_ref: (3, H)   out_ref: (TB, L, H)
    tb, L, H = x_ref.shape
    M = tb * L

    # (TB, L, H) -> (M, H): leading-dim merge (layout no-op when L % 8 == 0).
    x = x_ref[...].reshape(M, H)

    # One MXU pass for all six conv taps, f32 accumulation.
    # Column order: [b_prev, t_prev | uni, b_cur, t_cur | t_next].
    p = jnp.dot(x, w_ref[...], preferred_element_type=jnp.float32)     # (M, 6H)

    # Sequence position of every flattened row, WITHOUT an integer modulo:
    # 3-D iota along the seq axis, merged to a single (M, 1) int column.
    seq = jax.lax.broadcasted_iota(jnp.int32, (tb, L, 1), 1).reshape(M, 1)

    # "previous" slab: result[t] = slab[t-1], zero at sequence starts.  One XLU roll
    # covers both the bigram and trigram x[t-1] taps; the select also zeroes any
    # cross-batch / cross-block bleed rows (they land exactly on seq == 0).
    prev = pltpu.roll(p[:, 0:2 * H], shift=1, axis=0)                  # (M, 2H)
    prev = jnp.where(seq == 0, 0.0, prev)

    # "next" slab: result[t] = slab[t+1], zero at sequence ends (shift M-1 == -1).
    nxt = pltpu.roll(p[:, 5 * H:6 * H], shift=M - 1, axis=0)           # (M, H)
    nxt = jnp.where(seq == L - 1, 0.0, nxt)

    b = b_ref[...].astype(jnp.float32)                                 # (3, H)

    uni = p[:, 2 * H:3 * H] + b[0:1, :]
    bi = prev[:, 0:H] + p[:, 3 * H:4 * H] + b[1:2, :]
    tri = prev[:, H:2 * H] + p[:, 4 * H:5 * H] + nxt + b[2:3, :]

    ctx = jnp.maximum(jnp.maximum(uni, bi), tri)                       # f32 epilogue
    out_ref[...] = ctx.reshape(tb, L, H).astype(out_ref.dtype)


def phrase_level_forward(word_feat, img_feat, mask, params, *,
                         mxu_dtype=jnp.float32, out_dtype=jnp.float32,
                         batch_block=None, target_rows=512, num_cores=1,
                         single_buffer_weights=False):
    """word_feat: (B, L, H).  Returns phrase-level context features (B, L, H).

    mxu_dtype=bf16 is valid on ALL TPU generations (incl. v5e) -- accumulation and the
    bias/max epilogue stay f32.  Set num_cores=2 on v7x so the parallel grid has >= 2
    steps; set single_buffer_weights=True for large H to avoid double-buffering the
    (H, 6H) weight slab.

    TODO(synk): AlternatingAttention is not defined in the reference source; the
    (ques_att_p, img_att_p) attention step is not implemented, we return the
    phrase-level context features (the conv/max hot path) instead.
    """
    B, L, H = word_feat.shape
    f32 = jnp.float32

    # Stack the six Conv1d taps, "previous" taps first (see kernel column order).
    taps = [
        params["wb"][:, :, 0],   # bigram  tap on x[t-1]
        params["wt"][:, :, 0],   # trigram tap on x[t-1]
        params["wu"][:, :, 0],   # unigram tap on x[t]
        params["wb"][:, :, 1],   # bigram  tap on x[t]
        params["wt"][:, :, 1],   # trigram tap on x[t]
        params["wt"][:, :, 2],   # trigram tap on x[t+1]
    ]
    w_all = jnp.concatenate([jnp.transpose(t) for t in taps], axis=1)      # (H, 6H)
    b_all = jnp.stack([params["bu"], params["bb"], params["bt"]], axis=0)  # (3, H)

    x = word_feat.astype(mxu_dtype)
    w_all = w_all.astype(mxu_dtype)
    b_all = b_all.astype(f32)

    in_bytes = jnp.dtype(mxu_dtype).itemsize
    out_bytes = jnp.dtype(out_dtype).itemsize
    w_bufs = 1 if single_buffer_weights else 2

    def _vmem_bytes(bb):
        blk = bb * L * H
        return (2 * blk * in_bytes            # double-buffered input blocks
                + 2 * blk * out_bytes         # double-buffered output blocks
                + w_bufs * H * 6 * H * in_bytes
                + w_bufs * 3 * H * 4
                + bb * L * 6 * H * 4          # live (M, 6H) f32 matmul result
                + 4 * blk * 4)                # epilogue slabs / spill headroom

    if batch_block is None:
        bb = max(1, min(B, pl.cdiv(target_rows, L)))     # aim for ~target_rows M rows
        if num_cores > 1 and B >= num_cores:
            bb = min(bb, pl.cdiv(B, num_cores))          # keep all TensorCores busy
        budget = 48 << 20                                 # safe on v7x's 64 MiB VMEM
        while bb > 1 and _vmem_bytes(bb) > budget:
            bb -= 1
        batch_block = bb
    grid = (pl.cdiv(B, batch_block),)                     # ragged last block is OK

    vmem_limit = max(32 << 20, min(64 << 20, (_vmem_bytes(batch_block) * 4) // 3))

    def _const_spec(shape):
        idx = lambda b: tuple(0 for _ in shape)
        if single_buffer_weights:
            # Constant index_map -> double-buffering buys nothing; keep one copy.
            return pl.BlockSpec(shape, idx, pipeline_mode=pl.Buffered(1))
        return pl.BlockSpec(shape, idx)

    context_feat = pl.pallas_call(
        _phrase_kernel,
        out_shape=jax.ShapeDtypeStruct((B, L, H), out_dtype),
        grid_spec=pltpu.PrefetchScalarGridSpec(
            num_scalar_prefetch=0,
            grid=grid,
            in_specs=[
                pl.BlockSpec((batch_block, L, H), lambda b: (b, 0, 0)),  # word_feat
                _const_spec((H, 6 * H)),                                 # stacked W
                _const_spec((3, H)),                                     # stacked bias
            ],
            out_specs=pl.BlockSpec((batch_block, L, H), lambda b: (b, 0, 0)),
        ),
        compiler_params=pltpu.CompilerParams(
            dimension_semantics=("parallel",),
            vmem_limit_bytes=int(vmem_limit)),
    )(x, w_all, b_all)

    return context_feat


def init_params(key, hidden_size):
    """Deterministic synthetic parameters matching nn.Conv1d shapes."""
    ks = jax.random.split(key, 6)
    H = hidden_size
    scale = 1.0 / jnp.sqrt(H)
    return {
        "wu": jax.random.uniform(ks[0], (H, H, 1), jnp.float32, -scale, scale),
        "bu": jax.random.uniform(ks[1], (H,), jnp.float32, -scale, scale),
        "wb": jax.random.uniform(ks[2], (H, H, 2), jnp.float32, -scale, scale),
        "bb": jax.random.uniform(ks[3], (H,), jnp.float32, -scale, scale),
        "wt": jax.random.uniform(ks[4], (H, H, 3), jnp.float32, -scale, scale),
        "bt": jax.random.uniform(ks[5], (H,), jnp.float32, -scale, scale),
    }


def _reference_jax(word_feat, params):
    """Pure-JAX reference of the conv/max path (sanity check)."""
    B, L, H = word_feat.shape
    x = word_feat
    zero = jnp.zeros((B, 1, H), x.dtype)
    x_prev = jnp.concatenate([zero, x[:, :-1]], axis=1)
    x_next = jnp.concatenate([x[:, 1:], zero], axis=1)

    uni = jnp.einsum("blh,oh->blo", x, params["wu"][:, :, 0]) + params["bu"]
    bi = (jnp.einsum("blh,oh->blo", x_prev, params["wb"][:, :, 0])
          + jnp.einsum("blh,oh->blo", x, params["wb"][:, :, 1]) + params["bb"])
    tri = (jnp.einsum("blh,oh->blo", x_prev, params["wt"][:, :, 0])
           + jnp.einsum("blh,oh->blo", x, params["wt"][:, :, 1])
           + jnp.einsum("blh,oh->blo", x_next, params["wt"][:, :, 2]) + params["bt"])
    return jnp.maximum(jnp.maximum(uni, bi), tri)


if __name__ == "__main__":
    B, L, H = 2, 8, 32          # batch, seq_length, hidden_size
    N_IMG = 196                 # image regions (unused by the implemented path)

    key = jax.random.PRNGKey(0)
    k_x, k_img, k_p = jax.random.split(key, 3)

    word_feat = jax.random.normal(k_x, (B, L, H), jnp.float32)
    img_feat = jax.random.normal(k_img, (B, N_IMG, H), jnp.float32)
    mask = jnp.ones((B, L), jnp.float32)

    params = init_params(k_p, H)
    ref = _reference_jax(word_feat, params)

    # f32 MXU path, f32 output (exact vs reference).
    context_feat = phrase_level_forward(word_feat, img_feat, mask, params)
    context_feat = jax.block_until_ready(context_feat)
    assert jnp.allclose(context_feat, ref, atol=1e-5, rtol=1e-5), "f32 mismatch vs reference"

    # bf16 MXU operands + bf16 output (valid on v5e/v6e/v7x), f32 accumulate/epilogue.
    context_bf16 = phrase_level_forward(word_feat, img_feat, mask, params,
                                        mxu_dtype=jnp.bfloat16, out_dtype=jnp.bfloat16)
    context_bf16 = jax.block_until_ready(context_bf16)
    assert jnp.allclose(context_bf16.astype(jnp.float32), ref,
                        atol=5e-2, rtol=5e-2), "bf16 mismatch vs reference"

    print("KERNEL_OK")
</pallas_src>

<mosaic_0001>
module attributes {stable_mosaic.version = 11 : i64} {
  func.func @_phrase_kernel(%arg0: i32, %arg1: memref<2x8x32xf32, #tpu.memory_space<vmem>>, %arg2: memref<32x192xf32, #tpu.memory_space<vmem>>, %arg3: memref<3x32xf32, #tpu.memory_space<vmem>>, %arg4: memref<2x8x32xf32, #tpu.memory_space<vmem>>) attributes {dimension_semantics = [#tpu.dimension_semantics<parallel>], iteration_bounds = array<i64: 1>, scalar_prefetch = 0 : i64, scratch_operands = 0 : i64, tpu.core_type = #tpu.core_type<tc>, window_params = [{transform_indices = @transform_0, window_bounds = array<i64: 2, 8, 32>}, {pipeline_mode = #tpu.pipeline_mode<synchronous>, transform_indices = @transform_1, window_bounds = array<i64: 32, 192>}, {pipeline_mode = #tpu.pipeline_mode<synchronous>, transform_indices = @transform_2, window_bounds = array<i64: 3, 32>}, {transform_indices = @transform_3, window_bounds = array<i64: 2, 8, 32>}]} {
    %c0 = arith.constant 0 : index
    %c0_0 = arith.constant 0 : index
    %c0_1 = arith.constant 0 : index
    %0 = vector.load %arg1[%c0, %c0_0, %c0_1] : memref<2x8x32xf32, #tpu.memory_space<vmem>>, vector<2x8x32xf32>
    %1 = vector.shape_cast %0 : vector<2x8x32xf32> to vector<16x32xf32>
    %c0_2 = arith.constant 0 : index
    %c0_3 = arith.constant 0 : index
    %2 = vector.load %arg2[%c0_2, %c0_3] : memref<32x192xf32, #tpu.memory_space<vmem>>, vector<32x192xf32>
    %cst = arith.constant dense<0.000000e+00> : vector<16x192xf32>
    %3 = tpu.matmul %1, %2, %cst {dimension_numbers = #tpu.dot_dimension_numbers<[1], [0], [0], [1], [0, 0, 1, 1], [], []>} : vector<16x32xf32>, vector<32x192xf32>, vector<16x192xf32> -> vector<16x192xf32>
    %4 = tpu.iota {dimensions = array<i32: 1>} : vector<2x8x1xi32>
    %5 = vector.shape_cast %4 : vector<2x8x1xi32> to vector<16x1xi32>
    %6 = vector.extract_strided_slice %3 {offsets = [0, 0], sizes = [16, 64], strides = [1, 1]} : vector<16x192xf32> to vector<16x64xf32>
    %c1_i32 = arith.constant 1 : i32
    %7 = tpu.dynamic_rotate %6 by %c1_i32 dim 0 : vector<16x64xf32>, i32 -> vector<16x64xf32>
    %c0_i32 = arith.constant 0 : i32
    %8 = vector.broadcast %c0_i32 : i32 to vector<16x1xi32>
    %9 = arith.cmpi eq, %5, %8 : vector<16x1xi32>
    %cst_4 = arith.constant 0.000000e+00 : f32
    %10 = vector.shape_cast %9 : vector<16x1xi1> to vector<16x1xi1>
    %11 = vector.broadcast %10 : vector<16x1xi1> to vector<16x64xi1>
    %12 = vector.broadcast %cst_4 : f32 to vector<16x64xf32>
    %13 = arith.select %11, %12, %7 : vector<16x64xi1>, vector<16x64xf32>
    %14 = vector.extract_strided_slice %3 {offsets = [0, 160], sizes = [16, 32], strides = [1, 1]} : vector<16x192xf32> to vector<16x32xf32>
    %c15_i32 = arith.constant 15 : i32
    %15 = tpu.dynamic_rotate %14 by %c15_i32 dim 0 : vector<16x32xf32>, i32 -> vector<16x32xf32>
    %c7_i32 = arith.constant 7 : i32
    %16 = vector.broadcast %c7_i32 : i32 to vector<16x1xi32>
    %17 = arith.cmpi eq, %5, %16 : vector<16x1xi32>
    %cst_5 = arith.constant 0.000000e+00 : f32
    %18 = vector.shape_cast %17 : vector<16x1xi1> to vector<16x1xi1>
    %19 = vector.broadcast %18 : vector<16x1xi1> to vector<16x32xi1>
    %20 = vector.broadcast %cst_5 : f32 to vector<16x32xf32>
    %21 = arith.select %19, %20, %15 : vector<16x32xi1>, vector<16x32xf32>
    %c0_6 = arith.constant 0 : index
    %c0_7 = arith.constant 0 : index
    %22 = vector.load %arg3[%c0_6, %c0_7] : memref<3x32xf32, #tpu.memory_space<vmem>>, vector<3x32xf32>
    %23 = vector.extract_strided_slice %3 {offsets = [0, 64], sizes = [16, 32], strides = [1, 1]} : vector<16x192xf32> to vector<16x32xf32>
    %24 = vector.extract_strided_slice %22 {offsets = [0, 0], sizes = [1, 32], strides = [1, 1]} : vector<3x32xf32> to vector<1x32xf32>
    %25 = vector.broadcast %24 : vector<1x32xf32> to vector<16x32xf32>
    %26 = arith.addf %23, %25 : vector<16x32xf32>
    %27 = vector.extract_strided_slice %13 {offsets = [0, 0], sizes = [16, 32], strides = [1, 1]} : vector<16x64xf32> to vector<16x32xf32>
    %28 = vector.extract_strided_slice %3 {offsets = [0, 96], sizes = [16, 32], strides = [1, 1]} : vector<16x192xf32> to vector<16x32xf32>
    %29 = arith.addf %27, %28 : vector<16x32xf32>
    %30 = vector.extract_strided_slice %22 {offsets = [1, 0], sizes = [1, 32], strides = [1, 1]} : vector<3x32xf32> to vector<1x32xf32>
    %31 = vector.broadcast %30 : vector<1x32xf32> to vector<16x32xf32>
    %32 = arith.addf %29, %31 : vector<16x32xf32>
    %33 = vector.extract_strided_slice %13 {offsets = [0, 32], sizes = [16, 32], strides = [1, 1]} : vector<16x64xf32> to vector<16x32xf32>
    %34 = vector.extract_strided_slice %3 {offsets = [0, 128], sizes = [16, 32], strides = [1, 1]} : vector<16x192xf32> to vector<16x32xf32>
    %35 = arith.addf %33, %34 : vector<16x32xf32>
    %36 = arith.addf %35, %21 : vector<16x32xf32>
    %37 = vector.extract_strided_slice %22 {offsets = [2, 0], sizes = [1, 32], strides = [1, 1]} : vector<3x32xf32> to vector<1x32xf32>
    %38 = vector.broadcast %37 : vector<1x32xf32> to vector<16x32xf32>
    %39 = arith.addf %36, %38 : vector<16x32xf32>
    %40 = arith.maximumf %26, %32 : vector<16x32xf32>
    %41 = arith.maximumf %40, %39 : vector<16x32xf32>
    %42 = vector.shape_cast %41 : vector<16x32xf32> to vector<2x8x32xf32>
    %c0_8 = arith.constant 0 : index
    %c0_9 = arith.constant 0 : index
    %c0_10 = arith.constant 0 : index
    %43 = vector.load %arg4[%c0_8, %c0_9, %c0_10] : memref<2x8x32xf32, #tpu.memory_space<vmem>>, vector<2x8x32xf32>
    tpu.vector_store %arg4[%c0_8, %c0_9, %c0_10], %42 {strides = array<i32>} : memref<2x8x32xf32, #tpu.memory_space<vmem>>, vector<2x8x32xf32>,
    return
  }
  func.func @transform_0(%arg0: i32) -> (i32, i32, i32) {
    %c0_i32 = arith.constant 0 : i32
    %c0_i32_0 = arith.constant 0 : i32
    %c0_i32_1 = arith.constant 0 : i32
    return %arg0, %c0_i32, %c0_i32_0 : i32, i32, i32
  }
  func.func @transform_1(%arg0: i32) -> (i32, i32) {
    %c0_i32 = arith.constant 0 : i32
    %c0_i32_0 = arith.constant 0 : i32
    %c0_i32_1 = arith.constant 0 : i32
    return %c0_i32, %c0_i32_0 : i32, i32
  }
  func.func @transform_2(%arg0: i32) -> (i32, i32) {
    %c0_i32 = arith.constant 0 : i32
    %c0_i32_0 = arith.constant 0 : i32
    %c0_i32_1 = arith.constant 0 : i32
    return %c0_i32, %c0_i32_0 : i32, i32
  }
  func.func @transform_3(%arg0: i32) -> (i32, i32, i32) {
    %c0_i32 = arith.constant 0 : i32
    %c0_i32_0 = arith.constant 0 : i32
    %c0_i32_1 = arith.constant 0 : i32
    return %arg0, %c0_i32, %c0_i32_0 : i32, i32, i32
  }
}

</mosaic_0001>

<llo_original>
// kernel: tpu_custom_call.1
$region0: #{tpu_custom_call.1}
  #allocation0 [shape = 'u32[]', space=smem, size = 0x4, offset = 0x4, fixed_abs, tag = 'smem constant byte address 0x4 - core index']
  #allocation1 [shape = 'u32[72,128]{1,0:T(1,128)}', space=vmem, size = 0x9000, scoped, tag = 'internal scratch']
  %s0 = inlined_call_operand.hbm [shape: f32[2,8,32], index: 0, kind: input, shape index: {}]
  %s1 = inlined_call_operand.hbm [shape: f32[32,192], index: 1, kind: input, shape index: {}]
  %s2 = inlined_call_operand.hbm [shape: f32[3,32], index: 2, kind: input, shape index: {}]
  %s3 = inlined_call_operand.hbm [shape: f32[2,8,32], index: 3, kind: output, shape index: {}]
  %s4 = sld [smem:[#allocation0]]
  $region34: #{tpu_custom_call.1} parent=0
    _
  %s6 = ssub.s32 1, %s4
  %s7 = scalar_select 0, %s6, %s4
  $region1: #{tpu_custom_call.1} parent=0
    #allocation2 [shape = 'u8[8192]{0}', space=vmem, size = 0x2000, scoped, tag = 'input window, operand 0, single buffered']
    #allocation3 [shape = 's32[1]{0}', space=sflag, size = 0x4, scoped, tag = 'scoped memory for tpu_custom_call.1']
    #allocation4 [shape = 's32[1]{0}', space=sflag, size = 0x4, scoped, tag = 'scoped memory for tpu_custom_call.1']
    #allocation5 [shape = 'u8[32768]{0}', space=vmem, size = 0x8000, scoped, tag = 'input window, operand 1, single buffered']
    #allocation6 [shape = 's32[1]{0}', space=sflag, size = 0x4, scoped, tag = 'scoped memory for tpu_custom_call.1']
    #allocation7 [shape = 'u8[2048]{0}', space=vmem, size = 0x800, scoped, tag = 'input window, operand 2, single buffered']
    #allocation8 [shape = 'u8[8192]{0}', space=vmem, size = 0x2000, scoped, tag = 'output window, operand 0, single buffered']
    %8 = vsyncpa [#allocation3], 0
    %9 = vsyncpa [#allocation6], 0
    %10 = vsyncpa [#allocation4], 0
    // Predicated region
    $region2: #{tpu_custom_call.1} parent=1 // pred_check
      _
    $region3: #{tpu_custom_call.1} parent=1 // pred_check_branch
      %12 = sbr.rel (0) target = $region5
    $region4: #{tpu_custom_call.1} parent=1 // pred_region
      %14 = vsyncadd [#allocation3], 0
      %s15 = sshll.u32 %s0, 4
      %s16 = int_to_ptr.hbm [resolvable:$true] %s15
      %s17 = sshll.u32 [#allocation2], 4
      %s18 = int_to_ptr.vmem [resolvable:$true] %s17
      %23 = dma.hbm_to_vmem [thread:$0]  %s16, 256, %s18, [#allocation3], 128, 128, 8
    $region5: #{tpu_custom_call.1} parent=1 // pred_fallthru
      _
    // Predicated region
    $region6: #{tpu_custom_call.1} parent=1 // pred_check
      _
    $region7: #{tpu_custom_call.1} parent=1 // pred_check_branch
      %25 = sbr.rel (0) target = $region9
    $region8: #{tpu_custom_call.1} parent=1 // pred_region
      %27 = vsyncadd [#allocation6], 0
      %s28 = sshll.u32 %s1, 4
      %s29 = int_to_ptr.hbm [resolvable:$true] %s28
      %s30 = sshll.u32 [#allocation5], 4
      %s31 = int_to_ptr.vmem [resolvable:$true] %s30
      %36 = dma.hbm_to_vmem [thread:$0]  %s29, 1024, %s31, [#allocation6], 256, 256, 16
    $region9: #{tpu_custom_call.1} parent=1 // pred_fallthru
      _
    // Predicated region
    $region10: #{tpu_custom_call.1} parent=1 // pred_check
      _
    $region11: #{tpu_custom_call.1} parent=1 // pred_check_branch
      %38 = sbr.rel (0) target = $region13
    $region12: #{tpu_custom_call.1} parent=1 // pred_region
      %40 = vsyncadd [#allocation6], 0
      %s42 = sshll.u32 %s2, 4
      %s43 = int_to_ptr.hbm [resolvable:$true] %s42
      %s44 = sshll.u32 [#allocation7], 4
      %s45 = int_to_ptr.vmem [resolvable:$true] %s44
      %47 = dma.hbm_to_vmem [thread:$0]  %s43, 64, %s45, [#allocation6]
    $region13: #{tpu_custom_call.1} parent=1 // pred_fallthru
      _
    // Predicated region
    $region14: #{tpu_custom_call.1} parent=1 // pred_check
      _
    $region15: #{tpu_custom_call.1} parent=1 // pred_check_branch
      %49 = sbr.rel (0) target = $region17
    $region16: #{tpu_custom_call.1} parent=1 // pred_region
      %51 = dma.done [#allocation3], 256
    $region17: #{tpu_custom_call.1} parent=1 // pred_fallthru
      _
    // Predicated region
    $region18: #{tpu_custom_call.1} parent=1 // pred_check
      _
    $region19: #{tpu_custom_call.1} parent=1 // pred_check_branch
      %53 = sbr.rel (0) target = $region21
    $region20: #{tpu_custom_call.1} parent=1 // pred_region
      %55 = dma.done [#allocation6], 1024
    $region21: #{tpu_custom_call.1} parent=1 // pred_fallthru
      _
    // Predicated region
    $region22: #{tpu_custom_call.1} parent=1 // pred_check
      _
    $region23: #{tpu_custom_call.1} parent=1 // pred_check_branch
      %57 = sbr.rel (0) target = $region25
    $region24: #{tpu_custom_call.1} parent=1 // pred_region
      %59 = dma.done [#allocation6], 64
    $region25: #{tpu_custom_call.1} parent=1 // pred_fallthru
      _
    %v60 = vld [vmem:[#allocation2] sm:$0xff]
    %v61 = vld [vmem:[#allocation2 + $0x8] sm:$0xff]
    %v62 = vld [vmem:[#allocation5] sm:$0xff]
    %v63 = vld [vmem:[#allocation5 + $0x8] sm:$0xff]
    %v64 = vld [vmem:[#allocation5 + $0x10] sm:$0xff]
    %v65 = vld [vmem:[#allocation5 + $0x18] sm:$0xff]
    %v66 = vld [vmem:[#allocation5 + $0x20] sm:$0xff]
    %v67 = vld [vmem:[#allocation5 + $0x28] sm:$0xff]
    %v68 = vld [vmem:[#allocation5 + $0x30] sm:$0xff]
    %v69 = vld [vmem:[#allocation5 + $0x38] sm:$0xff]
    %vm70 = vcmask 261120
    %v72 = vsel %vm70, %v60, 0
    %v75 = vsel %vm70, %v61, 0
    %77 = vmatpush.msra.mxu0 0.0
    %78 = vmatpush.msra.mxu0 0.0
    %79 = vmatpush.msra.mxu0 0.0
    %80 = vmatpush.msra.mxu0 0.0
    %81 = vmatpush.msra.mxu0 0.0
    %82 = vmatpush.msra.mxu0 0.0
    %83 = vmatpush.msra.mxu0 0.0
    %84 = vmatpush.msra.mxu0 0.0
    %85 = vmatpush.msra.mxu0 0.0
    %86 = vmatpush.msra.mxu0 0.0
    %87 = vmatpush.msra.mxu0 0.0
    %88 = vmatpush.msra.mxu0 0.0
    %89 = vmatpush.msra.mxu0 %v68
    %90 = vmatpush.msra.mxu0 %v66
    %91 = vmatpush.msra.mxu0 %v64
    %92 = vmatpush.msra.mxu0 %v62
    %93 = vmatmul.f32.gmra.mxu0 %v72
    %v94 = vpop.f32.mrf.mxu0
    %v95 = vadd.f32 0.0, %v94
    %96 = vmatmul.f32.gmra.mxu0 %v75
    %v97 = vpop.f32.mrf.mxu0
    %v98 = vadd.f32 0.0, %v97
    %99 = vdwg.mxu0
    %100 = vmatpush.msra.mxu0 0.0
    %101 = vmatpush.msra.mxu0 0.0
    %102 = vmatpush.msra.mxu0 0.0
    %103 = vmatpush.msra.mxu0 0.0
    %104 = vmatpush.msra.mxu0 0.0
    %105 = vmatpush.msra.mxu0 0.0
    %106 = vmatpush.msra.mxu0 0.0
    %107 = vmatpush.msra.mxu0 0.0
    %108 = vmatpush.msra.mxu0 0.0
    %109 = vmatpush.msra.mxu0 0.0
    %110 = vmatpush.msra.mxu0 0.0
    %111 = vmatpush.msra.mxu0 0.0
    %112 = vmatpush.msra.mxu0 %v69
    %113 = vmatpush.msra.mxu0 %v67
    %114 = vmatpush.msra.mxu0 %v65
    %115 = vmatpush.msra.mxu0 %v63
    %116 = vmatmul.f32.gmra.mxu0 %v72
    %v117 = vpop.f32.mrf.mxu0
    %v118 = vadd.f32 0.0, %v117
    %119 = vmatmul.f32.gmra.mxu0 %v75
    %v120 = vpop.f32.mrf.mxu0
    %v121 = vadd.f32 0.0, %v120
    %122 = vdwg.mxu0
    %v123 = vlaneseq
    %v124 = vshrl.u32 %v123, 7
    %v125 = vrot.slane %v95, 7
    %v126 = vrot.slane %v98, 7
    %vm127 = vcmp.lt.s32.totalorder %v124, 1
    %v128 = vsel %vm127, %v125, %v126
    %v129 = vsel %vm127, %v126, %v125
    %vm130 = vcmp.eq.s32.totalorder %v124, 0
    %v131 = vsel %vm130, 1, 0
    %vm132 = vcmp.eq.s32.totalorder %v131, 1
    %v133 = vsel %vm132, 0.0, %v129
    %v134 = vsel %vm132, 0.0, %v128
    %137 = vrot.lane.b32.xlu0 %v118, 96
    %v138 = vpop.permute.xlu0 %137
    %139 = vrot.lane.b32.xlu0 %v121, 96
    %v140 = vpop.permute.xlu0 %139
    %v143 = vrot.slane %v138, 1
    %v144 = vrot.slane %v140, 1
    %vm145 = vcmp.lt.s32.totalorder %v124, 7
    %v146 = vsel %vm145, %v143, %v144
    %v147 = vsel %vm145, %v144, %v143
    %vm148 = vcmp.eq.s32.totalorder %v124, 7
    %v149 = vsel %vm148, 1, 0
    %vm150 = vcmp.eq.s32.totalorder %v149, 1
    %v151 = vsel %vm150, 0.0, %v146
    %v152 = vsel %vm150, 0.0, %v147
    %v153 = vld [vmem:[#allocation7] sm:$0x7]
    %v154 = vperm.slane %v153, 0
    %156 = vrot.lane.b32.xlu0 %v154, 64
    %v157 = vpop.permute.xlu0 %156
    %v159 = vadd.f32 %v95, %v157
    %v160 = vadd.f32 %v98, %v157
    %163 = vrot.lane.b32.xlu0 %v95, 32
    %v164 = vpop.permute.xlu0 %163
    %165 = vrot.lane.b32.xlu0 %v98, 32
    %v166 = vpop.permute.xlu0 %165
    %v169 = vadd.f32 %v133, %v164
    %v170 = vadd.f32 %v134, %v166
    %v171 = vperm.slane %v153, 1
    %v172 = vadd.f32 %v169, %v171
    %v173 = vadd.f32 %v170, %v171
    %174 = vrot.lane.b32.xlu0 %v118, 32
    %v175 = vpop.permute.xlu0 %174
    %176 = vrot.lane.b32.xlu0 %v121, 32
    %v177 = vpop.permute.xlu0 %176
    %v180 = vadd.f32 %v133, %v175
    %v181 = vadd.f32 %v134, %v177
    %184 = vrot.lane.b32.xlu0 %v151, 32
    %v185 = vpop.permute.xlu0 %184
    %186 = vrot.lane.b32.xlu0 %v152, 32
    %v187 = vpop.permute.xlu0 %186
    %v190 = vadd.f32 %v180, %v185
    %v191 = vadd.f32 %v181, %v187
    %v192 = vperm.slane %v153, 2
    %194 = vrot.lane.b32.xlu0 %v192, 32
    %v195 = vpop.permute.xlu0 %194
    %v197 = vadd.f32 %v190, %v195
    %v198 = vadd.f32 %v191, %v195
    %201 = vrot.lane.b32.xlu0 %v172, 64
    %v202 = vpop.permute.xlu0 %201
    %203 = vrot.lane.b32.xlu0 %v173, 64
    %v204 = vpop.permute.xlu0 %203
    %v207 = vmax.f32 %v159, %v202
    %v208 = vmax.f32 %v160, %v204
    %211 = vrot.lane.b32.xlu0 %v197, 32
    %v212 = vpop.permute.xlu0 %211
    %213 = vrot.lane.b32.xlu0 %v198, 32
    %v214 = vpop.permute.xlu0 %213
    %v217 = vmax.f32 %v207, %v212
    %v218 = vmax.f32 %v208, %v214
    %221 = vrot.lane.b32.xlu0 %v217, 64
    %v222 = vpop.permute.xlu0 %221
    %223 = vrot.lane.b32.xlu0 %v218, 64
    %v224 = vpop.permute.xlu0 %223
    %227 = vst.msk [vmem:[#allocation8] sm:$0xff] %vm70, %v222
    %228 = vst.msk [vmem:[#allocation8 + $0x8] sm:$0xff] %vm70, %v224
    // Predicated region
    $region26: #{tpu_custom_call.1} parent=1 // pred_check
      _
    $region27: #{tpu_custom_call.1} parent=1 // pred_check_branch
      %230 = sbr.rel (0) target = $region29
    $region28: #{tpu_custom_call.1} parent=1 // pred_region
      %232 = vsyncadd [#allocation4], 0
      %s233 = sshll.u32 [#allocation8], 4
      %s234 = int_to_ptr.vmem [resolvable:$true] %s233
      %s235 = sshll.u32 %s3, 4
      %s236 = int_to_ptr.hbm [resolvable:$true] %s235
      %241 = dma.vmem_to_hbm [thread:$0]  %s234, 256, %s236, [#allocation4], 128, 128, 8
    $region29: #{tpu_custom_call.1} parent=1 // pred_fallthru
      _
    // Predicated region
    $region30: #{tpu_custom_call.1} parent=1 // pred_check
      _
    $region31: #{tpu_custom_call.1} parent=1 // pred_check_branch
      %243 = sbr.rel (0) target = $region33
    $region32: #{tpu_custom_call.1} parent=1 // pred_region
      %245 = dma.done [#allocation4], 256
    $region33: #{tpu_custom_call.1} parent=1 // pred_fallthru
      _
    %246 = vsyncpa [#allocation3], 1
    %247 = vsyncpa [#allocation6], 1
    %248 = vsyncpa [#allocation4], 1

</llo_original>
